<compile_context>
chip_gen: v7x
topology: tpu7x:2x2x1
jax: 0.10.0
libtpu: 0.0.40
codegen_flags: <defaults>
</compile_context>

<pallas_src>
import functools
import math

import jax
import jax.numpy as jnp
from jax import lax
from jax.experimental import pallas as pl
from jax.experimental.pallas import tpu as pltpu

_PS_FLOOR = 1e-44                      # torch module's probs_sum floor
_LOG_FLOOR = math.log(_PS_FLOOR)       # ~ -101.3287
_LANE = 128
_VMEM_LIMIT = 32 * 1024 * 1024


def _cdiv(a, b):
    return (a + b - 1) // b


def _round_up(x, m):
    return ((x + m - 1) // m) * m


def _pa_kernel(beta_ref, nvalid_ref, p1_ref, p2_ref, out_ref, *, lane_dense):
    # beta_ref, nvalid_ref : scalar-prefetch refs in SMEM, shapes (1,)
    # p1_ref, p2_ref       : (TILE_M, C) row-blocks read straight from the
    #                        (N, C) inputs (contiguous HBM rows, single DMA)
    # out_ref              : (1, 1, 1) per-tile partial sum of log(probs_sum)
    pid = pl.program_id(0)
    tile_m = p1_ref.shape[0]

    beta = beta_ref[0]
    n_valid = nvalid_ref[0]

    x1 = p1_ref[...].astype(jnp.float32)
    x2 = p2_ref[...].astype(jnp.float32)

    if lane_dense:
        # Relayout (TILE_M, C) -> (C, TILE_M) on the XLU so the exps and the
        # class-axis reductions run lane-dense (batch on the 128-wide lanes,
        # tiny class axis on sublanes).  MXU/XLU are otherwise idle here.
        x1 = jnp.transpose(x1)
        x2 = jnp.transpose(x2)
        red_axis, sample_axis = 0, 1
    else:
        # Fallback layout: classes stay on lanes; reductions over axis=1.
        red_axis, sample_axis = 1, 0

    x1 = x1 * beta
    x2 = x2 * beta

    # Numerically stable softmax pieces; the normalizing divides are folded
    # into the log below (no per-element division).
    m1 = jnp.max(x1, axis=red_axis, keepdims=True)
    m2 = jnp.max(x2, axis=red_axis, keepdims=True)
    e1 = jnp.exp(x1 - m1)
    e2 = jnp.exp(x2 - m2)
    s1 = jnp.sum(e1, axis=red_axis, keepdims=True)
    s2 = jnp.sum(e2, axis=red_axis, keepdims=True)
    s12 = jnp.sum(e1 * e2, axis=red_axis, keepdims=True)

    # log(sum_c softmax(x1)_c * softmax(x2)_c) = log(s12) - log(s1*s2)
    # (one fused log per sample saved on the EUP; s1*s2 <= C^2, no overflow).
    log_ps = jnp.log(s12) - jnp.log(s1 * s2)
    # torch floors probs_sum at 1e-44; same floor in log space. Also catches
    # s12 underflowing to 0 (-> -inf) under TPU flush-to-zero.
    log_ps = jnp.maximum(log_ps, jnp.float32(_LOG_FLOOR))

    last = pl.num_programs(0) - 1

    @pl.when(pid == last)
    def _():
        # Only the last tile can contain out-of-range (garbage) rows; mask
        # them.  Garbage may be NaN/Inf but `where` selects 0.0 for those
        # columns, so nothing propagates into the partial sum.
        idx = pid * tile_m + lax.broadcasted_iota(jnp.int32, log_ps.shape, sample_axis)
        masked = jnp.where(idx < n_valid, log_ps, jnp.float32(0.0))
        out_ref[...] = jnp.sum(masked, axis=sample_axis, keepdims=True)[None]

    @pl.when(pid != last)
    def _():
        out_ref[...] = jnp.sum(log_ps, axis=sample_axis, keepdims=True)[None]


@functools.partial(jax.jit, static_argnames=("tile_n", "lane_dense"))
def _pa_step(beta, log_post, preds1, preds2, tile_n, lane_dense):
    assert preds1.shape == preds2.shape and preds1.ndim == 2
    N, C = preds1.shape

    beta = jnp.asarray(beta, jnp.float32).reshape(1)
    log_post = jnp.asarray(log_post, jnp.float32).reshape(1)
    n_valid = jnp.asarray([N], jnp.int32)

    # ---- static tile selection (no wrapper-side padding of the inputs) ----
    # A (tile, C) VMEM tile is lane-padded to (tile, 128), so cap the tile so
    # 2 inputs x 2 pipeline buffers + f32 temporaries fit in 32 MiB scoped
    # VMEM on every generation (v7x only has 64 MiB physical).
    cap = 8192 if lane_dense else 2048
    tile = min(int(tile_n), cap)
    # Give v7x's two TensorCores >= 2 steps each (megacore + DMA overlap).
    tile = min(tile, _round_up(_cdiv(N, 4), _LANE))
    # Never exceed the batch itself (rounded to the 8-sublane granule).
    tile = min(tile, _round_up(N, 8))
    tile = _round_up(max(tile, 8), 8)
    grid = _cdiv(N, tile)

    kernel = functools.partial(_pa_kernel, lane_dense=lane_dense)

    partials = pl.pallas_call(
        kernel,
        out_shape=jax.ShapeDtypeStruct((grid, 1, 1), jnp.float32),
        grid_spec=pltpu.PrefetchScalarGridSpec(
            num_scalar_prefetch=2,          # beta, n_valid -> SMEM
            grid=(grid,),
            in_specs=[
                pl.BlockSpec((tile, C), lambda i, *_: (i, 0)),
                pl.BlockSpec((tile, C), lambda i, *_: (i, 0)),
            ],
            out_specs=pl.BlockSpec((1, 1, 1), lambda i, *_: (i, 0, 0)),
        ),
        compiler_params=pltpu.CompilerParams(
            dimension_semantics=("parallel",),
            vmem_limit_bytes=_VMEM_LIMIT,
        ),
    )(beta, n_valid, preds1, preds2)

    return (log_post + jnp.sum(partials)).reshape(1)


_FORCE_LANE_SPARSE = False


def posterior_agreement_step(beta, log_post, preds1, preds2, tile_n=8192):
    """One forward()/evaluate() accumulation step; returns updated log_post, (1,) f32."""
    global _FORCE_LANE_SPARSE
    if not _FORCE_LANE_SPARSE:
        try:
            return _pa_step(beta, log_post, preds1, preds2,
                            tile_n=int(tile_n), lane_dense=True)
        except Exception:
            # TODO(synk): in-kernel XLU transpose failed to lower on this
            # toolchain; fall back to the transpose-free lane-sparse variant.
            _FORCE_LANE_SPARSE = True
    return _pa_step(beta, log_post, preds1, preds2,
                    tile_n=int(tile_n), lane_dense=False)


class PosteriorAgreementKernelJax:
    """Stateful wrapper mirroring the PyTorch module (state kept in plain JAX)."""

    def __init__(self, beta0=None):
        if beta0 is None:
            # deterministic stand-in for torch.rand(1)
            beta0 = float(jax.random.uniform(jax.random.PRNGKey(42), ()))
        if beta0 < 0.0:
            raise ValueError("'beta' must be non-negative.")
        self.beta = jnp.asarray([beta0], jnp.float32)    # "trainable" param, shape (1,)
        self.log_post = jnp.asarray([0.0], jnp.float32)  # buffer

    def forward(self, preds1, preds2):
        # TODO(synk): the PyTorch probs_sum.register_hook(torch.nan_to_num) is an
        # autograd-only gradient sanitizer; this port is forward-pass only.
        self.log_post = posterior_agreement_step(self.beta, self.log_post, preds1, preds2)
        return self.log_post

    def evaluate(self, beta_opt, preds1, preds2):
        # Same math, explicit beta (mirrors the no-grad evaluate path).
        self.log_post = posterior_agreement_step(beta_opt, self.log_post, preds1, preds2)
        return self.log_post

    def reset(self):
        self.log_post = jnp.asarray([0.0], jnp.float32)

    def log_posterior(self):
        return self.log_post

    def posterior(self):
        return jnp.exp(self.log_post)


def _reference(beta, log_post, preds1, preds2):
    probs1 = jax.nn.softmax(beta * preds1.astype(jnp.float32), axis=1)
    probs2 = jax.nn.softmax(beta * preds2.astype(jnp.float32), axis=1)
    ps = jnp.sum(probs1 * probs2, axis=1)
    ps = jnp.maximum(ps, jnp.float32(_PS_FLOOR))
    return log_post + jnp.sum(jnp.log(ps))


if __name__ == "__main__":
    key = jax.random.PRNGKey(0)
    k1, k2, k3, k4 = jax.random.split(key, 4)

    # Case 1: tiny shape, single grid step (block exactly covers the batch).
    N1, C1 = 16, 8
    a1 = jax.random.normal(k1, (N1, C1), dtype=jnp.float32)
    a2 = jax.random.normal(k2, (N1, C1), dtype=jnp.float32)

    model = PosteriorAgreementKernelJax(beta0=0.7)
    out1 = jax.block_until_ready(model.forward(a1, a2))
    ref1 = _reference(jnp.float32(0.7), jnp.zeros((1,), jnp.float32), a1, a2)
    assert jnp.allclose(out1, ref1, rtol=2e-5, atol=1e-4), (out1, ref1)

    # Case 2: non-multiple-of-tile batch with a multi-step grid (exercises the
    # ragged last block, the pl.when-gated mask, and the per-tile partials).
    N2, C2 = 300, 10
    b1 = jax.random.normal(k3, (N2, C2), dtype=jnp.float32)
    b2 = jax.random.normal(k4, (N2, C2), dtype=jnp.float32)
    out2 = jax.block_until_ready(
        posterior_agreement_step(jnp.float32(0.7), jnp.zeros((1,), jnp.float32),
                                 b1, b2, tile_n=128))
    ref2 = _reference(jnp.float32(0.7), jnp.zeros((1,), jnp.float32), b1, b2)
    assert jnp.allclose(out2, ref2, rtol=2e-5, atol=1e-4), (out2, ref2)

    print("KERNEL_OK")
</pallas_src>

<mosaic_0001>
module attributes {stable_mosaic.version = 11 : i64} {
  func.func @_pa_kernel(%arg0: i32, %arg1: memref<1xf32, #tpu.memory_space<smem>>, %arg2: memref<1xi32, #tpu.memory_space<smem>>, %arg3: memref<16x8xf32, #tpu.memory_space<vmem>>, %arg4: memref<16x8xf32, #tpu.memory_space<vmem>>, %arg5: memref<1x1x1xf32, #tpu.memory_space<vmem>>) attributes {dimension_semantics = [#tpu.dimension_semantics<parallel>], iteration_bounds = array<i64: 1>, scalar_prefetch = 2 : i64, scratch_operands = 0 : i64, tpu.core_type = #tpu.core_type<tc>, window_params = [{transform_indices = @transform_0, window_bounds = array<i64: 16, 8>}, {transform_indices = @transform_1, window_bounds = array<i64: 16, 8>}, {transform_indices = @transform_2, window_bounds = array<i64: 1, 1, 1>}]} {
    %c0 = arith.constant 0 : index
    %0 = memref.load %arg1[%c0] : memref<1xf32, #tpu.memory_space<smem>>
    %c0_0 = arith.constant 0 : index
    %1 = memref.load %arg2[%c0_0] : memref<1xi32, #tpu.memory_space<smem>>
    %c0_1 = arith.constant 0 : index
    %c0_2 = arith.constant 0 : index
    %2 = vector.load %arg3[%c0_1, %c0_2] : memref<16x8xf32, #tpu.memory_space<vmem>>, vector<16x8xf32>
    %c0_3 = arith.constant 0 : index
    %c0_4 = arith.constant 0 : index
    %3 = vector.load %arg4[%c0_3, %c0_4] : memref<16x8xf32, #tpu.memory_space<vmem>>, vector<16x8xf32>
    %4 = tpu.transpose %2, [1, 0] : vector<16x8xf32> -> vector<8x16xf32>
    %5 = tpu.transpose %3, [1, 0] : vector<16x8xf32> -> vector<8x16xf32>
    %6 = vector.broadcast %0 : f32 to vector<8x16xf32>
    %7 = arith.mulf %4, %6 : vector<8x16xf32>
    %8 = vector.broadcast %0 : f32 to vector<8x16xf32>
    %9 = arith.mulf %5, %8 : vector<8x16xf32>
    %cst = arith.constant dense<0xFF800000> : vector<16xf32>
    %10 = vector.multi_reduction <maximumf>, %7, %cst [0] : vector<8x16xf32> to vector<16xf32>
    %11 = vector.shape_cast %10 : vector<16xf32> to vector<1x16xf32>
    %cst_5 = arith.constant dense<0xFF800000> : vector<16xf32>
    %12 = vector.multi_reduction <maximumf>, %9, %cst_5 [0] : vector<8x16xf32> to vector<16xf32>
    %13 = vector.shape_cast %12 : vector<16xf32> to vector<1x16xf32>
    %14 = vector.broadcast %11 : vector<1x16xf32> to vector<8x16xf32>
    %15 = arith.subf %7, %14 : vector<8x16xf32>
    %16 = math.exp %15 : vector<8x16xf32>
    %17 = vector.broadcast %13 : vector<1x16xf32> to vector<8x16xf32>
    %18 = arith.subf %9, %17 : vector<8x16xf32>
    %19 = math.exp %18 : vector<8x16xf32>
    %cst_6 = arith.constant dense<0.000000e+00> : vector<16xf32>
    %20 = vector.multi_reduction <add>, %16, %cst_6 [0] : vector<8x16xf32> to vector<16xf32>
    %21 = vector.shape_cast %20 : vector<16xf32> to vector<1x16xf32>
    %cst_7 = arith.constant dense<0.000000e+00> : vector<16xf32>
    %22 = vector.multi_reduction <add>, %19, %cst_7 [0] : vector<8x16xf32> to vector<16xf32>
    %23 = vector.shape_cast %22 : vector<16xf32> to vector<1x16xf32>
    %24 = arith.mulf %16, %19 : vector<8x16xf32>
    %cst_8 = arith.constant dense<0.000000e+00> : vector<16xf32>
    %25 = vector.multi_reduction <add>, %24, %cst_8 [0] : vector<8x16xf32> to vector<16xf32>
    %26 = vector.shape_cast %25 : vector<16xf32> to vector<1x16xf32>
    %27 = math.log %26 : vector<1x16xf32>
    %28 = arith.mulf %21, %23 : vector<1x16xf32>
    %29 = math.log %28 : vector<1x16xf32>
    %30 = arith.subf %27, %29 : vector<1x16xf32>
    %cst_9 = arith.constant -101.313744 : f32
    %31 = vector.broadcast %cst_9 : f32 to vector<1x16xf32>
    %32 = arith.maximumf %30, %31 : vector<1x16xf32>
    %c0_i32 = arith.constant 0 : i32
    %33 = arith.cmpi eq, %arg0, %c0_i32 : i32
    %34 = arith.extui %33 : i1 to i32
    %c0_i32_10 = arith.constant 0 : i32
    %35 = arith.cmpi ne, %34, %c0_i32_10 : i32
    scf.if %35 {
      %c16_i32 = arith.constant 16 : i32
      %39 = arith.muli %arg0, %c16_i32 : i32
      %40 = tpu.iota {dimensions = array<i32: 1>} : vector<1x16xi32>
      %41 = vector.broadcast %39 : i32 to vector<1x16xi32>
      %42 = arith.addi %41, %40 : vector<1x16xi32>
      %43 = vector.broadcast %1 : i32 to vector<1x16xi32>
      %44 = arith.cmpi slt, %42, %43 : vector<1x16xi32>
      %cst_13 = arith.constant 0.000000e+00 : f32
      %45 = vector.broadcast %cst_13 : f32 to vector<1x16xf32>
      %46 = arith.select %44, %32, %45 : vector<1x16xi1>, vector<1x16xf32>
      %cst_14 = arith.constant dense<0.000000e+00> : vector<1xf32>
      %47 = vector.multi_reduction <add>, %46, %cst_14 [1] : vector<1x16xf32> to vector<1xf32>
      %48 = vector.shape_cast %47 : vector<1xf32> to vector<1x1xf32>
      %49 = vector.shape_cast %48 : vector<1x1xf32> to vector<1x1x1xf32>
      %c0_15 = arith.constant 0 : index
      %c0_16 = arith.constant 0 : index
      %c0_17 = arith.constant 0 : index
      %50 = vector.load %arg5[%c0_15, %c0_16, %c0_17] : memref<1x1x1xf32, #tpu.memory_space<vmem>>, vector<1x1x1xf32>
      tpu.vector_store %arg5[%c0_15, %c0_16, %c0_17], %49 {strides = array<i32>} : memref<1x1x1xf32, #tpu.memory_space<vmem>>, vector<1x1x1xf32>,
    } else {
    }
    %c0_i32_11 = arith.constant 0 : i32
    %36 = arith.cmpi ne, %arg0, %c0_i32_11 : i32
    %37 = arith.extui %36 : i1 to i32
    %c0_i32_12 = arith.constant 0 : i32
    %38 = arith.cmpi ne, %37, %c0_i32_12 : i32
    scf.if %38 {
      %cst_13 = arith.constant dense<0.000000e+00> : vector<1xf32>
      %39 = vector.multi_reduction <add>, %32, %cst_13 [1] : vector<1x16xf32> to vector<1xf32>
      %40 = vector.shape_cast %39 : vector<1xf32> to vector<1x1xf32>
      %41 = vector.shape_cast %40 : vector<1x1xf32> to vector<1x1x1xf32>
      %c0_14 = arith.constant 0 : index
      %c0_15 = arith.constant 0 : index
      %c0_16 = arith.constant 0 : index
      %42 = vector.load %arg5[%c0_14, %c0_15, %c0_16] : memref<1x1x1xf32, #tpu.memory_space<vmem>>, vector<1x1x1xf32>
      tpu.vector_store %arg5[%c0_14, %c0_15, %c0_16], %41 {strides = array<i32>} : memref<1x1x1xf32, #tpu.memory_space<vmem>>, vector<1x1x1xf32>,
    } else {
    }
    return
  }
  func.func @transform_0(%arg0: i32, %arg1: memref<1xf32, #tpu.memory_space<smem>>, %arg2: memref<1xi32, #tpu.memory_space<smem>>) -> (i32, i32) {
    %c0_i32 = arith.constant 0 : i32
    %c0_i32_0 = arith.constant 0 : i32
    return %arg0, %c0_i32 : i32, i32
  }
  func.func @transform_1(%arg0: i32, %arg1: memref<1xf32, #tpu.memory_space<smem>>, %arg2: memref<1xi32, #tpu.memory_space<smem>>) -> (i32, i32) {
    %c0_i32 = arith.constant 0 : i32
    %c0_i32_0 = arith.constant 0 : i32
    return %arg0, %c0_i32 : i32, i32
  }
  func.func @transform_2(%arg0: i32, %arg1: memref<1xf32, #tpu.memory_space<smem>>, %arg2: memref<1xi32, #tpu.memory_space<smem>>) -> (i32, i32, i32) {
    %c0_i32 = arith.constant 0 : i32
    %c0_i32_0 = arith.constant 0 : i32
    %c0_i32_1 = arith.constant 0 : i32
    return %arg0, %c0_i32, %c0_i32_0 : i32, i32, i32
  }
}

module attributes {stable_mosaic.version = 11 : i64} {
  func.func @_pa_kernel(%arg0: i32, %arg1: memref<1xf32, #tpu.memory_space<smem>>, %arg2: memref<1xi32, #tpu.memory_space<smem>>, %arg3: memref<16x8xf32, #tpu.memory_space<vmem>>, %arg4: memref<16x8xf32, #tpu.memory_space<vmem>>, %arg5: memref<1x1x1xf32, #tpu.memory_space<vmem>>) attributes {dimension_semantics = [#tpu.dimension_semantics<parallel>], iteration_bounds = array<i64: 1>, scalar_prefetch = 2 : i64, scratch_operands = 0 : i64, tpu.core_type = #tpu.core_type<tc>, window_params = [{transform_indices = @transform_0, window_bounds = array<i64: 16, 8>}, {transform_indices = @transform_1, window_bounds = array<i64: 16, 8>}, {transform_indices = @transform_2, window_bounds = array<i64: 1, 1, 1>}]} {
    %c0 = arith.constant 0 : index
    %0 = memref.load %arg1[%c0] : memref<1xf32, #tpu.memory_space<smem>>
    %c0_0 = arith.constant 0 : index
    %1 = memref.load %arg2[%c0_0] : memref<1xi32, #tpu.memory_space<smem>>
    %c0_1 = arith.constant 0 : index
    %c0_2 = arith.constant 0 : index
    %2 = vector.load %arg3[%c0_1, %c0_2] : memref<16x8xf32, #tpu.memory_space<vmem>>, vector<16x8xf32>
    %c0_3 = arith.constant 0 : index
    %c0_4 = arith.constant 0 : index
    %3 = vector.load %arg4[%c0_3, %c0_4] : memref<16x8xf32, #tpu.memory_space<vmem>>, vector<16x8xf32>
    %4 = vector.broadcast %0 : f32 to vector<16x8xf32>
    %5 = arith.mulf %2, %4 : vector<16x8xf32>
    %6 = vector.broadcast %0 : f32 to vector<16x8xf32>
    %7 = arith.mulf %3, %6 : vector<16x8xf32>
    %cst = arith.constant dense<0xFF800000> : vector<16xf32>
    %8 = vector.multi_reduction <maximumf>, %5, %cst [1] : vector<16x8xf32> to vector<16xf32>
    %9 = vector.shape_cast %8 : vector<16xf32> to vector<16x1xf32>
    %cst_5 = arith.constant dense<0xFF800000> : vector<16xf32>
    %10 = vector.multi_reduction <maximumf>, %7, %cst_5 [1] : vector<16x8xf32> to vector<16xf32>
    %11 = vector.shape_cast %10 : vector<16xf32> to vector<16x1xf32>
    %12 = vector.broadcast %9 : vector<16x1xf32> to vector<16x8xf32>
    %13 = arith.subf %5, %12 : vector<16x8xf32>
    %14 = math.exp %13 : vector<16x8xf32>
    %15 = vector.broadcast %11 : vector<16x1xf32> to vector<16x8xf32>
    %16 = arith.subf %7, %15 : vector<16x8xf32>
    %17 = math.exp %16 : vector<16x8xf32>
    %cst_6 = arith.constant dense<0.000000e+00> : vector<16xf32>
    %18 = vector.multi_reduction <add>, %14, %cst_6 [1] : vector<16x8xf32> to vector<16xf32>
    %19 = vector.shape_cast %18 : vector<16xf32> to vector<16x1xf32>
    %cst_7 = arith.constant dense<0.000000e+00> : vector<16xf32>
    %20 = vector.multi_reduction <add>, %17, %cst_7 [1] : vector<16x8xf32> to vector<16xf32>
    %21 = vector.shape_cast %20 : vector<16xf32> to vector<16x1xf32>
    %22 = arith.mulf %14, %17 : vector<16x8xf32>
    %cst_8 = arith.constant dense<0.000000e+00> : vector<16xf32>
    %23 = vector.multi_reduction <add>, %22, %cst_8 [1] : vector<16x8xf32> to vector<16xf32>
    %24 = vector.shape_cast %23 : vector<16xf32> to vector<16x1xf32>
    %25 = math.log %24 : vector<16x1xf32>
    %26 = arith.mulf %19, %21 : vector<16x1xf32>
    %27 = math.log %26 : vector<16x1xf32>
    %28 = arith.subf %25, %27 : vector<16x1xf32>
    %cst_9 = arith.constant -101.313744 : f32
    %29 = vector.broadcast %cst_9 : f32 to vector<16x1xf32>
    %30 = arith.maximumf %28, %29 : vector<16x1xf32>
    %c0_i32 = arith.constant 0 : i32
    %31 = arith.cmpi eq, %arg0, %c0_i32 : i32
    %32 = arith.extui %31 : i1 to i32
    %c0_i32_10 = arith.constant 0 : i32
    %33 = arith.cmpi ne, %32, %c0_i32_10 : i32
    scf.if %33 {
      %c16_i32 = arith.constant 16 : i32
      %37 = arith.muli %arg0, %c16_i32 : i32
      %38 = tpu.iota {dimensions = array<i32: 0>} : vector<16x1xi32>
      %39 = vector.broadcast %37 : i32 to vector<16x1xi32>
      %40 = arith.addi %39, %38 : vector<16x1xi32>
      %41 = vector.broadcast %1 : i32 to vector<16x1xi32>
      %42 = arith.cmpi slt, %40, %41 : vector<16x1xi32>
      %cst_13 = arith.constant 0.000000e+00 : f32
      %43 = vector.broadcast %cst_13 : f32 to vector<16x1xf32>
      %44 = arith.select %42, %30, %43 : vector<16x1xi1>, vector<16x1xf32>
      %cst_14 = arith.constant dense<0.000000e+00> : vector<1xf32>
      %45 = vector.multi_reduction <add>, %44, %cst_14 [0] : vector<16x1xf32> to vector<1xf32>
      %46 = vector.shape_cast %45 : vector<1xf32> to vector<1x1xf32>
      %47 = vector.shape_cast %46 : vector<1x1xf32> to vector<1x1x1xf32>
      %c0_15 = arith.constant 0 : index
      %c0_16 = arith.constant 0 : index
      %c0_17 = arith.constant 0 : index
      %48 = vector.load %arg5[%c0_15, %c0_16, %c0_17] : memref<1x1x1xf32, #tpu.memory_space<vmem>>, vector<1x1x1xf32>
      tpu.vector_store %arg5[%c0_15, %c0_16, %c0_17], %47 {strides = array<i32>} : memref<1x1x1xf32, #tpu.memory_space<vmem>>, vector<1x1x1xf32>,
    } else {
    }
    %c0_i32_11 = arith.constant 0 : i32
    %34 = arith.cmpi ne, %arg0, %c0_i32_11 : i32
    %35 = arith.extui %34 : i1 to i32
    %c0_i32_12 = arith.constant 0 : i32
    %36 = arith.cmpi ne, %35, %c0_i32_12 : i32
    scf.if %36 {
      %cst_13 = arith.constant dense<0.000000e+00> : vector<1xf32>
      %37 = vector.multi_reduction <add>, %30, %cst_13 [0] : vector<16x1xf32> to vector<1xf32>
      %38 = vector.shape_cast %37 : vector<1xf32> to vector<1x1xf32>
      %39 = vector.shape_cast %38 : vector<1x1xf32> to vector<1x1x1xf32>
      %c0_14 = arith.constant 0 : index
      %c0_15 = arith.constant 0 : index
      %c0_16 = arith.constant 0 : index
      %40 = vector.load %arg5[%c0_14, %c0_15, %c0_16] : memref<1x1x1xf32, #tpu.memory_space<vmem>>, vector<1x1x1xf32>
      tpu.vector_store %arg5[%c0_14, %c0_15, %c0_16], %39 {strides = array<i32>} : memref<1x1x1xf32, #tpu.memory_space<vmem>>, vector<1x1x1xf32>,
    } else {
    }
    return
  }
  func.func @transform_0(%arg0: i32, %arg1: memref<1xf32, #tpu.memory_space<smem>>, %arg2: memref<1xi32, #tpu.memory_space<smem>>) -> (i32, i32) {
    %c0_i32 = arith.constant 0 : i32
    %c0_i32_0 = arith.constant 0 : i32
    return %arg0, %c0_i32 : i32, i32
  }
  func.func @transform_1(%arg0: i32, %arg1: memref<1xf32, #tpu.memory_space<smem>>, %arg2: memref<1xi32, #tpu.memory_space<smem>>) -> (i32, i32) {
    %c0_i32 = arith.constant 0 : i32
    %c0_i32_0 = arith.constant 0 : i32
    return %arg0, %c0_i32 : i32, i32
  }
  func.func @transform_2(%arg0: i32, %arg1: memref<1xf32, #tpu.memory_space<smem>>, %arg2: memref<1xi32, #tpu.memory_space<smem>>) -> (i32, i32, i32) {
    %c0_i32 = arith.constant 0 : i32
    %c0_i32_0 = arith.constant 0 : i32
    %c0_i32_1 = arith.constant 0 : i32
    return %arg0, %c0_i32, %c0_i32_0 : i32, i32, i32
  }
}

</mosaic_0001>

<llo_original>
// kernel: _pa_step.1
$region0: #{_pa_step.1}
  #allocation0 [shape = 'u32[]', space=smem, size = 0x4, offset = 0x4, fixed_abs, tag = 'smem constant byte address 0x4 - core index']
  #allocation1 [shape = 'u32[144,128]{1,0:T(1,128)}', space=vmem, size = 0x12000, scoped, tag = 'internal scratch']
  #allocation2 [shape = 's32[1]{0}', space=sflag, size = 0x4, scoped, tag = 'scoped memory for _pa_step.1']
  #allocation3 [shape = 'f32[1]{0:T(128)S(6)}', space=smem, size = 0x200, scoped, tag = 'prefetched SMEM operand 0']
  #allocation4 [shape = 's32[1]{0:T(128)S(6)}', space=smem, size = 0x200, scoped, tag = 'prefetched SMEM operand 1']
  %s0 = inlined_call_operand.<no memory space> [shape: f32[1], index: 0, kind: input, shape index: {}]
  %s1 = inlined_call_operand.<no memory space> [shape: s32[1], index: 1, kind: input, shape index: {}]
  %s2 = inlined_call_operand.vmem [shape: f32[16,8], index: 2, kind: input, shape index: {}]
  %s3 = inlined_call_operand.vmem [shape: f32[16,8], index: 3, kind: input, shape index: {}]
  %s4 = inlined_call_operand.hbm [shape: f32[1,1,1], index: 4, kind: output, shape index: {}]
  %s5 = sld [smem:[#allocation0]]
  $region26: #{_pa_step.1} parent=0
    _
  %s7 = ssub.s32 1, %s5
  %s8 = scalar_select 0, %s7, %s5
  %9 = sst [smem:[#allocation3]] %s0
  %10 = sst [smem:[#allocation4]] %s1
  $region1: #{_pa_step.1} parent=0
    #allocation5 [shape = 'u8[512]{0}', space=vmem, size = 0x400, scoped, tag = 'output window, operand 0, single buffered']
    #allocation6 [shape = 's32[1]{0}', space=sflag, size = 0x4, scoped, tag = 'scoped memory for _pa_step.1']
    %11 = vsyncpa [#allocation6], 0
    // Predicated region
    $region2: #{_pa_step.1} parent=1 // pred_check
      _
    $region3: #{_pa_step.1} parent=1 // pred_check_branch
      %13 = sbr.rel (0) target = $region5
    $region4: #{_pa_step.1} parent=1 // pred_region
      _
    $region5: #{_pa_step.1} parent=1 // pred_fallthru
      _
    // Predicated region
    $region6: #{_pa_step.1} parent=1 // pred_check
      _
    $region7: #{_pa_step.1} parent=1 // pred_check_branch
      %15 = sbr.rel (0) target = $region9
    $region8: #{_pa_step.1} parent=1 // pred_region
      _
    $region9: #{_pa_step.1} parent=1 // pred_fallthru
      _
    %s16 = sld [smem:[#allocation3]]
    %s17 = sld [smem:[#allocation4]]
    %v18 = vld [vmem:[%s2] sm:$0xff]
    %v19 = vld [vmem:[%s2 + $0x8] sm:$0xff]
    %v20 = vld [vmem:[%s3] sm:$0xff]
    %v21 = vld [vmem:[%s3 + $0x8] sm:$0xff]
    %22 = vxpose.xlu0.b32.start [1/16] %v18, 128
    %23 = vxpose.xlu0.b32.cont [2/16] %v19, 128
    %24 = vxpose.xlu0.b32.cont [3/16] 0.0, 128
    %25 = vxpose.xlu0.b32.cont [4/16] 0.0, 128
    %26 = vxpose.xlu0.b32.cont [5/16] 0.0, 128
    %27 = vxpose.xlu0.b32.cont [6/16] 0.0, 128
    %28 = vxpose.xlu0.b32.cont [7/16] 0.0, 128
    %29 = vxpose.xlu0.b32.cont [8/16] 0.0, 128
    %30 = vxpose.xlu0.b32.cont [9/16] 0.0, 128
    %31 = vxpose.xlu0.b32.cont [10/16] 0.0, 128
    %32 = vxpose.xlu0.b32.cont [11/16] 0.0, 128
    %33 = vxpose.xlu0.b32.cont [12/16] 0.0, 128
    %34 = vxpose.xlu0.b32.cont [13/16] 0.0, 128
    %35 = vxpose.xlu0.b32.cont [14/16] 0.0, 128
    %36 = vxpose.xlu0.b32.cont [15/16] 0.0, 128
    %37 = vxpose.xlu0.b32.end [16/16] 0.0, 128
    %v38 = vpop.trf.xlu0
    %v39 = vpop.trf.xlu0
    %v40 = vpop.trf.xlu0
    %v41 = vpop.trf.xlu0
    %v42 = vpop.trf.xlu0
    %v43 = vpop.trf.xlu0
    %v44 = vpop.trf.xlu0
    %v45 = vpop.trf.xlu0
    %v46 = vpop.trf.xlu0
    %v47 = vpop.trf.xlu0
    %v48 = vpop.trf.xlu0
    %v49 = vpop.trf.xlu0
    %v50 = vpop.trf.xlu0
    %v51 = vpop.trf.xlu0
    %v52 = vpop.trf.xlu0
    %v53 = vpop.trf.xlu0
    %54 = vxpose.xlu0.b32.start [1/16] %v20, 128
    %55 = vxpose.xlu0.b32.cont [2/16] %v21, 128
    %56 = vxpose.xlu0.b32.cont [3/16] 0.0, 128
    %57 = vxpose.xlu0.b32.cont [4/16] 0.0, 128
    %58 = vxpose.xlu0.b32.cont [5/16] 0.0, 128
    %59 = vxpose.xlu0.b32.cont [6/16] 0.0, 128
    %60 = vxpose.xlu0.b32.cont [7/16] 0.0, 128
    %61 = vxpose.xlu0.b32.cont [8/16] 0.0, 128
    %62 = vxpose.xlu0.b32.cont [9/16] 0.0, 128
    %63 = vxpose.xlu0.b32.cont [10/16] 0.0, 128
    %64 = vxpose.xlu0.b32.cont [11/16] 0.0, 128
    %65 = vxpose.xlu0.b32.cont [12/16] 0.0, 128
    %66 = vxpose.xlu0.b32.cont [13/16] 0.0, 128
    %67 = vxpose.xlu0.b32.cont [14/16] 0.0, 128
    %68 = vxpose.xlu0.b32.cont [15/16] 0.0, 128
    %69 = vxpose.xlu0.b32.end [16/16] 0.0, 128
    %v70 = vpop.trf.xlu0
    %v71 = vpop.trf.xlu0
    %v72 = vpop.trf.xlu0
    %v73 = vpop.trf.xlu0
    %v74 = vpop.trf.xlu0
    %v75 = vpop.trf.xlu0
    %v76 = vpop.trf.xlu0
    %v77 = vpop.trf.xlu0
    %v78 = vpop.trf.xlu0
    %v79 = vpop.trf.xlu0
    %v80 = vpop.trf.xlu0
    %v81 = vpop.trf.xlu0
    %v82 = vpop.trf.xlu0
    %v83 = vpop.trf.xlu0
    %v84 = vpop.trf.xlu0
    %v85 = vpop.trf.xlu0
    %v86 = vstv %s16
    %v87 = vmul.f32 %v38, %v86
    %v88 = vmul.f32 %v70, %v86
    %vm89 = vcmask 130048
    %v90 = vsel %vm89, %v87, -inf
    %v91 = vrot.slane %v90, 4
    %v92 = vmax.f32 %v90, %v91
    %v93 = vrot.slane %v92, 2
    %v94 = vmax.f32 %v92, %v93
    %v95 = vrot.slane %v94, 1
    %v96 = vmax.f32 %v94, %v95
    %v97 = vsel %vm89, %v88, -inf
    %v98 = vrot.slane %v97, 4
    %v99 = vmax.f32 %v97, %v98
    %v100 = vrot.slane %v99, 2
    %v101 = vmax.f32 %v99, %v100
    %v102 = vrot.slane %v101, 1
    %v103 = vmax.f32 %v101, %v102
    %v104 = vsub.f32 %v87, %v96
    %v105 = vmul.f32 %v104, 1.442695
    %v106 = vpow.pop %v105
    %v107 = vsub.f32 %v88, %v103
    %v108 = vmul.f32 %v107, 1.442695
    %v109 = vpow.pop %v108
    %v110 = vsel %vm89, %v106, 0.0
    %v111 = vrot.slane %v110, 4
    %v112 = vadd.f32 %v110, %v111
    %v113 = vrot.slane %v112, 2
    %v114 = vadd.f32 %v112, %v113
    %v115 = vrot.slane %v114, 1
    %v116 = vadd.f32 %v114, %v115
    %v117 = vsel %vm89, %v109, 0.0
    %v118 = vrot.slane %v117, 4
    %v119 = vadd.f32 %v117, %v118
    %v120 = vrot.slane %v119, 2
    %v121 = vadd.f32 %v119, %v120
    %v122 = vrot.slane %v121, 1
    %v123 = vadd.f32 %v121, %v122
    %v124 = vmul.f32 %v106, %v109
    %v125 = vsel %vm89, %v124, 0.0
    %v126 = vrot.slane %v125, 4
    %v127 = vadd.f32 %v125, %v126
    %v128 = vrot.slane %v127, 2
    %v129 = vadd.f32 %v127, %v128
    %v130 = vrot.slane %v129, 1
    %v131 = vadd.f32 %v129, %v130
    %v132 = vlog2.pop %v131
    %v133 = vmul.f32 %v132, 0.6931472
    %v134 = vmul.f32 %v116, %v123
    %v135 = vlog2.pop %v134
    %v136 = vmul.f32 %v135, 0.6931472
    %v137 = vsub.f32 %v133, %v136
    %v138 = vmax.f32 %v137, -101.31374
    %p139 = scmp.eq.s32.totalorder 0, 0
    // Predicated region
    $region10: #{_pa_step.1} parent=1 // pred_check
      %p140 = pneg %p139
    $region11: #{_pa_step.1} parent=1 // pred_check_branch
      %142 = sbr.rel (%p140) target = $region13
    $region12: #{_pa_step.1} parent=1 // pred_region
      %s143 = smul.u32 0, 16
      %v144 = vlaneseq
      %v145 = vand.u32 %v144, 127
      %v146 = vstv %s143
      %v147 = vadd.s32 %v146, %v145
      %v148 = vstv %s17
      %vm149 = vcmp.lt.s32.totalorder %v147, %v148
      %v150 = vsel %vm149, %v138, 0.0
      %v151 = vsel %vm89, %v150, 0.0
      %152 = vadd.xlane.f32.xlu0 %v151
      %v153 = vpop.xlane.xlu0 %152
      %vm154 = vcmask 0
      %155 = vst.msk [vmem:[#allocation5] sm:$0x1] %vm154, %v153
    $region13: #{_pa_step.1} parent=1 // pred_fallthru
      _
    %p156 = scmp.ne.s32.totalorder 0, 0
    // Predicated region
    $region14: #{_pa_step.1} parent=1 // pred_check
      %p157 = pneg %p156
    $region15: #{_pa_step.1} parent=1 // pred_check_branch
      %159 = sbr.rel (%p157) target = $region17
    $region16: #{_pa_step.1} parent=1 // pred_region
      %v160 = vsel %vm89, %v138, 0.0
      %161 = vadd.xlane.f32.xlu0 %v160
      %v162 = vpop.xlane.xlu0 %161
      %vm163 = vcmask 0
      %164 = vst.msk [vmem:[#allocation5] sm:$0x1] %vm163, %v162
    $region17: #{_pa_step.1} parent=1 // pred_fallthru
      _
    // Predicated region
    $region18: #{_pa_step.1} parent=1 // pred_check
      _
    $region19: #{_pa_step.1} parent=1 // pred_check_branch
      %166 = sbr.rel (0) target = $region21
    $region20: #{_pa_step.1} parent=1 // pred_region
      %s168 = ssub.s32 16, 16
      %169 = vsyncadd [#allocation6], %s168
      %s171 = sshll.u32 [#allocation5], 4
      %s172 = int_to_ptr.vmem [resolvable:$true] %s171
      %174 = dma.vmem_to_hbm [thread:$0]  %s172, 16, %s4, [#allocation6]
    $region21: #{_pa_step.1} parent=1 // pred_fallthru
      _
    // Predicated region
    $region22: #{_pa_step.1} parent=1 // pred_check
      _
    $region23: #{_pa_step.1} parent=1 // pred_check_branch
      %176 = sbr.rel (0) target = $region25
    $region24: #{_pa_step.1} parent=1 // pred_region
      %177 = dma.done [#allocation6], 16
    $region25: #{_pa_step.1} parent=1 // pred_fallthru
      _
    %178 = vsyncpa [#allocation6], 1

// kernel: _pa_step.1
$region0: #{_pa_step.1}
  #allocation0 [shape = 'u32[]', space=smem, size = 0x4, offset = 0x4, fixed_abs, tag = 'smem constant byte address 0x4 - core index']
  #allocation1 [shape = 'u32[144,128]{1,0:T(1,128)}', space=vmem, size = 0x12000, scoped, tag = 'internal scratch']
  #allocation2 [shape = 's32[1]{0}', space=sflag, size = 0x4, scoped, tag = 'scoped memory for _pa_step.1']
  #allocation3 [shape = 'f32[1]{0:T(128)S(6)}', space=smem, size = 0x200, scoped, tag = 'prefetched SMEM operand 0']
  #allocation4 [shape = 's32[1]{0:T(128)S(6)}', space=smem, size = 0x200, scoped, tag = 'prefetched SMEM operand 1']
  %s0 = inlined_call_operand.<no memory space> [shape: f32[1], index: 0, kind: input, shape index: {}]
  %s1 = inlined_call_operand.<no memory space> [shape: s32[1], index: 1, kind: input, shape index: {}]
  %s2 = inlined_call_operand.vmem [shape: f32[16,8], index: 2, kind: input, shape index: {}]
  %s3 = inlined_call_operand.vmem [shape: f32[16,8], index: 3, kind: input, shape index: {}]
  %s4 = inlined_call_operand.hbm [shape: f32[1,1,1], index: 4, kind: output, shape index: {}]
  %s5 = sld [smem:[#allocation0]]
  $region26: #{_pa_step.1} parent=0
    _
  %s7 = ssub.s32 1, %s5
  %s8 = scalar_select 0, %s7, %s5
  %9 = sst [smem:[#allocation3]] %s0
  %10 = sst [smem:[#allocation4]] %s1
  $region1: #{_pa_step.1} parent=0
    #allocation5 [shape = 'u8[512]{0}', space=vmem, size = 0x400, scoped, tag = 'output window, operand 0, single buffered']
    #allocation6 [shape = 's32[1]{0}', space=sflag, size = 0x4, scoped, tag = 'scoped memory for _pa_step.1']
    %11 = vsyncpa [#allocation6], 0
    // Predicated region
    $region2: #{_pa_step.1} parent=1 // pred_check
      _
    $region3: #{_pa_step.1} parent=1 // pred_check_branch
      %13 = sbr.rel (0) target = $region5
    $region4: #{_pa_step.1} parent=1 // pred_region
      _
    $region5: #{_pa_step.1} parent=1 // pred_fallthru
      _
    // Predicated region
    $region6: #{_pa_step.1} parent=1 // pred_check
      _
    $region7: #{_pa_step.1} parent=1 // pred_check_branch
      %15 = sbr.rel (0) target = $region9
    $region8: #{_pa_step.1} parent=1 // pred_region
      _
    $region9: #{_pa_step.1} parent=1 // pred_fallthru
      _
    %s16 = sld [smem:[#allocation3]]
    %s17 = sld [smem:[#allocation4]]
    %v18 = vld [vmem:[%s2] sm:$0xff]
    %v19 = vld [vmem:[%s2 + $0x8] sm:$0xff]
    %v20 = vld [vmem:[%s3] sm:$0xff]
    %v21 = vld [vmem:[%s3 + $0x8] sm:$0xff]
    %v22 = vstv %s16
    %v23 = vmul.f32 %v18, %v22
    %v24 = vmul.f32 %v19, %v22
    %v25 = vmul.f32 %v20, %v22
    %v26 = vmul.f32 %v21, %v22
    %vm27 = vcmask 64512
    %v28 = vsel %vm27, %v23, -inf
    %29 = vmax.xlane.f32.xlu0 %v28
    %v30 = vpop.xlane.xlu0 %29
    %v31 = vsel %vm27, %v24, -inf
    %32 = vmax.xlane.f32.xlu0 %v31
    %v33 = vpop.xlane.xlu0 %32
    %v34 = vsel %vm27, %v25, -inf
    %35 = vmax.xlane.f32.xlu0 %v34
    %v36 = vpop.xlane.xlu0 %35
    %v37 = vsel %vm27, %v26, -inf
    %38 = vmax.xlane.f32.xlu0 %v37
    %v39 = vpop.xlane.xlu0 %38
    %v40 = vsub.f32 %v23, %v30
    %v41 = vsub.f32 %v24, %v33
    %v42 = vmul.f32 %v40, 1.442695
    %v43 = vpow.pop %v42
    %v44 = vmul.f32 %v41, 1.442695
    %v45 = vpow.pop %v44
    %v46 = vsub.f32 %v25, %v36
    %v47 = vsub.f32 %v26, %v39
    %v48 = vmul.f32 %v46, 1.442695
    %v49 = vpow.pop %v48
    %v50 = vmul.f32 %v47, 1.442695
    %v51 = vpow.pop %v50
    %v52 = vsel %vm27, %v43, 0.0
    %53 = vadd.xlane.f32.xlu0 %v52
    %v54 = vpop.xlane.xlu0 %53
    %v55 = vsel %vm27, %v45, 0.0
    %56 = vadd.xlane.f32.xlu0 %v55
    %v57 = vpop.xlane.xlu0 %56
    %v58 = vsel %vm27, %v49, 0.0
    %59 = vadd.xlane.f32.xlu0 %v58
    %v60 = vpop.xlane.xlu0 %59
    %v61 = vsel %vm27, %v51, 0.0
    %62 = vadd.xlane.f32.xlu0 %v61
    %v63 = vpop.xlane.xlu0 %62
    %v64 = vmul.f32 %v43, %v49
    %v65 = vmul.f32 %v45, %v51
    %v66 = vsel %vm27, %v64, 0.0
    %67 = vadd.xlane.f32.xlu0 %v66
    %v68 = vpop.xlane.xlu0 %67
    %v69 = vsel %vm27, %v65, 0.0
    %70 = vadd.xlane.f32.xlu0 %v69
    %v71 = vpop.xlane.xlu0 %70
    %v72 = vlog2.pop %v68
    %v73 = vmul.f32 %v72, 0.6931472
    %v74 = vlog2.pop %v71
    %v75 = vmul.f32 %v74, 0.6931472
    %v76 = vmul.f32 %v54, %v60
    %v77 = vmul.f32 %v57, %v63
    %v78 = vlog2.pop %v76
    %v79 = vmul.f32 %v78, 0.6931472
    %v80 = vlog2.pop %v77
    %v81 = vmul.f32 %v80, 0.6931472
    %v82 = vsub.f32 %v73, %v79
    %v83 = vsub.f32 %v75, %v81
    %v84 = vmax.f32 %v82, -101.31374
    %v85 = vmax.f32 %v83, -101.31374
    %p86 = scmp.eq.s32.totalorder 0, 0
    // Predicated region
    $region10: #{_pa_step.1} parent=1 // pred_check
      %p87 = pneg %p86
    $region11: #{_pa_step.1} parent=1 // pred_check_branch
      %89 = sbr.rel (%p87) target = $region13
    $region12: #{_pa_step.1} parent=1 // pred_region
      %s90 = smul.u32 0, 16
      %v91 = vlaneseq
      %v92 = vshrl.u32 %v91, 7
      %v93 = vadd.s32 %v92, 8
      %v94 = vstv %s90
      %v95 = vadd.s32 %v94, %v92
      %v96 = vadd.s32 %v94, %v93
      %v97 = vstv %s17
      %vm98 = vcmp.lt.s32.totalorder %v95, %v97
      %vm99 = vcmp.lt.s32.totalorder %v96, %v97
      %v100 = vsel %vm98, %v84, 0.0
      %v101 = vsel %vm99, %v85, 0.0
      %v102 = vadd.f32 %v100, %v101
      %v103 = vrot.slane %v102, 4
      %v104 = vadd.f32 %v102, %v103
      %v105 = vrot.slane %v104, 2
      %v106 = vadd.f32 %v104, %v105
      %v107 = vrot.slane %v106, 1
      %v108 = vadd.f32 %v106, %v107
      %vm109 = vcmask 0
      %110 = vst.msk [vmem:[#allocation5] sm:$0x1] %vm109, %v108
    $region13: #{_pa_step.1} parent=1 // pred_fallthru
      _
    %p111 = scmp.ne.s32.totalorder 0, 0
    // Predicated region
    $region14: #{_pa_step.1} parent=1 // pred_check
      %p112 = pneg %p111
    $region15: #{_pa_step.1} parent=1 // pred_check_branch
      %114 = sbr.rel (%p112) target = $region17
    $region16: #{_pa_step.1} parent=1 // pred_region
      %v115 = vadd.f32 %v84, %v85
      %v116 = vrot.slane %v115, 4
      %v117 = vadd.f32 %v115, %v116
      %v118 = vrot.slane %v117, 2
      %v119 = vadd.f32 %v117, %v118
      %v120 = vrot.slane %v119, 1
      %v121 = vadd.f32 %v119, %v120
      %vm122 = vcmask 0
      %123 = vst.msk [vmem:[#allocation5] sm:$0x1] %vm122, %v121
    $region17: #{_pa_step.1} parent=1 // pred_fallthru
      _
    // Predicated region
    $region18: #{_pa_step.1} parent=1 // pred_check
      _
    $region19: #{_pa_step.1} parent=1 // pred_check_branch
      %125 = sbr.rel (0) target = $region21
    $region20: #{_pa_step.1} parent=1 // pred_region
      %s127 = ssub.s32 16, 16
      %128 = vsyncadd [#allocation6], %s127
      %s130 = sshll.u32 [#allocation5], 4
      %s131 = int_to_ptr.vmem [resolvable:$true] %s130
      %133 = dma.vmem_to_hbm [thread:$0]  %s131, 16, %s4, [#allocation6]
    $region21: #{_pa_step.1} parent=1 // pred_fallthru
      _
    // Predicated region
    $region22: #{_pa_step.1} parent=1 // pred_check
      _
    $region23: #{_pa_step.1} parent=1 // pred_check_branch
      %135 = sbr.rel (0) target = $region25
    $region24: #{_pa_step.1} parent=1 // pred_region
      %136 = dma.done [#allocation6], 16
    $region25: #{_pa_step.1} parent=1 // pred_fallthru
      _
    %137 = vsyncpa [#allocation6], 1

</llo_original>
